<compile_context>
chip_gen: v6e
topology: v6e:2x2x1
jax: 0.10.0
libtpu: 0.0.40
codegen_flags: <defaults>
</compile_context>

<pallas_src>
import functools

import jax
import jax.numpy as jnp
from jax import lax
from jax.experimental import pallas as pl
from jax.experimental.pallas import tpu as pltpu


LANE = 128


def _round_up(x, m):
    return (x + m - 1) // m * m


# ----------------------------------------------------------------------------
# Kernel (built per static shape configuration)
# ----------------------------------------------------------------------------
def _make_kernel(*, tb, batch, bias_offsets, bias_widths):
    f32, bf16 = jnp.float32, jnp.bfloat16

    def kernel(hist_ref, ctx_ref,
               w1_ref, w2_ref, w3_ref, w4_ref, w5_ref, w6_ref, bias_ref,
               out_ref, part_ref):
        def mm(x, w_ref):
            # bf16 operands -> full-rate MXU on v5e/v6e/v7x; f32 accumulation.
            return jnp.dot(x.astype(bf16), w_ref[...], preferred_element_type=f32)

        def b(i):
            o = bias_offsets[i]
            return bias_ref[:, o:o + bias_widths[i]]      # (1, n) f32, 128-aligned

        h = hist_ref[...].astype(f32)

        # --- context_encoder: (Linear, Tanh) x3, Linear ---
        x = jnp.tanh(mm(h, w1_ref) + b(0))                # (tb, 256)
        x = jnp.tanh(mm(x, w2_ref) + b(1))                # (tb, 128)
        x = jnp.tanh(mm(x, w3_ref) + b(2))                # (tb, 128) pad lanes exactly 0
        ch = mm(x, w4_ref) + b(3)                         # (tb, 128) real ch in [:H]

        # --- osi task head: Linear, Tanh, Linear ---
        y = jnp.tanh(mm(ch, w5_ref) + b(4))               # (tb, 128)
        pred = mm(y, w6_ref) + b(5)                       # (tb, 128) real pred in [:G]

        # --- mask padded batch rows out of the reductions ---
        row = lax.broadcasted_iota(jnp.int32, (tb, 1), 0)
        valid = ((pl.program_id(0) * tb + row) < batch).astype(f32)   # (tb, 1)

        diff = pred - ctx_ref[...]                        # ctx is zero-padded to 128 lanes
        ssq_diff = jnp.sum(valid * diff * diff)           # -> sqrt-MSE (wrapper)
        ssq_ch = jnp.sum(valid * ch * ch)                 # -> L2^2 regularization (wrapper)

        # --- lane-dense packed tensor output: [ch_pad(128) | pred_pad(128)] ---
        out_ref[...] = jnp.concatenate([ch, pred], axis=-1)

        # --- per-tile partial sums, written as one full (8, 128) tile ---
        col = lax.broadcasted_iota(jnp.int32, (8, 128), 1)
        tile = jnp.where(col == 0, ssq_diff, jnp.where(col == 1, ssq_ch, 0.0))
        part_ref[...] = tile[None].astype(f32)

    return kernel


# ----------------------------------------------------------------------------
# One-time parameter preparation: bf16 weights, zero-padded to lane multiples,
# biases packed into a single lane-aligned f32 buffer.  Call once, reuse.
# ----------------------------------------------------------------------------
def prepare_params(params):
    ws, bs = {}, []
    cur_in = params["w1"].shape[0]            # history feature width (not padded)
    for i in range(1, 7):
        w = params[f"w{i}"].astype(jnp.float32)
        bvec = params[f"b{i}"].reshape(1, -1).astype(jnp.float32)
        out_w = w.shape[1]
        out_pad = _round_up(out_w, LANE)
        w_pad = jnp.pad(w, ((0, cur_in - w.shape[0]), (0, out_pad - out_w)))
        ws[f"w{i}"] = w_pad.astype(jnp.bfloat16)
        bs.append(jnp.pad(bvec, ((0, 0), (0, out_pad - out_w))))
        cur_in = out_pad
    prepped = dict(ws)
    prepped["bias"] = jnp.concatenate(bs, axis=-1)        # (1, 896) f32
    return prepped


# ----------------------------------------------------------------------------
# Fused forward
# ----------------------------------------------------------------------------
@functools.partial(jax.jit, static_argnames=("hdim", "gdim"))
def context_encoder_forward(history, context, prepped, *, hdim, gdim):
    """Returns (context_hidden, prediction, total_loss, regularization_loss)."""
    f32 = jnp.float32
    B, in_dim = history.shape

    ws = [prepped[f"w{i}"] for i in range(1, 7)]
    bias_pack = prepped["bias"]
    widths = tuple(int(w.shape[1]) for w in ws)           # padded out-widths
    offsets = tuple(int(sum(widths[:i])) for i in range(6))
    CW, PW = widths[3], widths[5]                         # padded ch / pred widths (128)
    OUT_W = CW + PW

    # --- batch tiling (TB multiple of 8; 256-row tiles once the batch is big) ---
    TB = 256 if B > 256 else max(8, _round_up(B, 8))
    B_pad = _round_up(B, TB)
    n_tiles = B_pad // TB

    hist = jnp.pad(history.astype(f32), ((0, B_pad - B), (0, 0)))
    ctx = jnp.pad(context.astype(f32), ((0, B_pad - B), (0, PW - gdim)))

    kernel = _make_kernel(tb=TB, batch=B, bias_offsets=offsets, bias_widths=widths)

    def row_block(feat):
        return pl.BlockSpec((TB, feat), lambda i: (i, 0))

    def const_block(a):
        return pl.BlockSpec(a.shape, lambda i: (0, 0))

    packed, partials = pl.pallas_call(
        kernel,
        grid=(n_tiles,),
        in_specs=[row_block(in_dim), row_block(PW),
                  *[const_block(w) for w in ws],
                  const_block(bias_pack)],
        out_specs=(pl.BlockSpec((TB, OUT_W), lambda i: (i, 0)),
                   pl.BlockSpec((1, 8, 128), lambda i: (i, 0, 0))),
        out_shape=(jax.ShapeDtypeStruct((B_pad, OUT_W), f32),
                   jax.ShapeDtypeStruct((n_tiles, 8, 128), f32)),
        compiler_params=pltpu.CompilerParams(dimension_semantics=("parallel",)),
    )(hist, ctx, *ws, bias_pack)

    ch = packed[:B, :hdim]
    pred = packed[:B, CW:CW + gdim]
    total_loss = jnp.sqrt(jnp.sum(partials[:, 0, 0]) / (B * gdim))
    reg_loss = jnp.float32(0.01) * jnp.sum(partials[:, 0, 1])
    return ch, pred, total_loss, reg_loss


# ----------------------------------------------------------------------------
# Parameter init (PyTorch nn.Linear-style uniform(+/- 1/sqrt(fan_in)))
# ----------------------------------------------------------------------------
def init_params(key, in_dim, hidden_dim, gt_context_dim):
    dims = [
        (in_dim, 256), (256, 128), (128, 64), (64, hidden_dim),    # encoder
        (hidden_dim, hidden_dim), (hidden_dim, gt_context_dim),    # osi head
    ]
    params = {}
    for i, (fin, fout) in enumerate(dims, start=1):
        key, kw, kb = jax.random.split(key, 3)
        bound = 1.0 / jnp.sqrt(jnp.float32(fin))
        params[f"w{i}"] = jax.random.uniform(kw, (fin, fout), jnp.float32, -bound, bound)
        params[f"b{i}"] = jax.random.uniform(kb, (1, fout), jnp.float32, -bound, bound)
    return params


# ----------------------------------------------------------------------------
# References
# ----------------------------------------------------------------------------
def reference_forward_bf16(history, context, p):
    """Mirrors the kernel's numerics (bf16 MXU operands, f32 everything else)."""
    bf16, f32 = jnp.bfloat16, jnp.float32

    def mm(x, w):
        return jnp.dot(x.astype(bf16), w.astype(bf16), preferred_element_type=f32)

    x = jnp.tanh(mm(history, p["w1"]) + p["b1"])
    x = jnp.tanh(mm(x, p["w2"]) + p["b2"])
    x = jnp.tanh(mm(x, p["w3"]) + p["b3"])
    ch = mm(x, p["w4"]) + p["b4"]
    reg = 0.01 * jnp.sum(ch * ch)
    y = jnp.tanh(mm(ch, p["w5"]) + p["b5"])
    pred = mm(y, p["w6"]) + p["b6"]
    loss = jnp.sqrt(jnp.mean((pred - context) ** 2))
    return ch, pred, loss, reg


def reference_forward_f32(history, context, p):
    """Exact f32 math (PyTorch module semantics)."""
    x = jnp.tanh(history @ p["w1"] + p["b1"])
    x = jnp.tanh(x @ p["w2"] + p["b2"])
    x = jnp.tanh(x @ p["w3"] + p["b3"])
    ch = x @ p["w4"] + p["b4"]
    reg = 0.01 * jnp.sum(ch * ch)
    y = jnp.tanh(ch @ p["w5"] + p["b5"])
    pred = y @ p["w6"] + p["b6"]
    loss = jnp.sqrt(jnp.mean((pred - context) ** 2))
    return ch, pred, loss, reg


def _run_and_check(key, batch, in_dim, hidden_dim, gt_dim, params, prepped):
    k_hist, k_ctx = jax.random.split(key)
    history = jax.random.normal(k_hist, (batch, in_dim), jnp.float32)
    context = jax.random.normal(k_ctx, (batch, gt_dim), jnp.float32)

    ch, pred, loss, reg = context_encoder_forward(
        history, context, prepped, hdim=hidden_dim, gdim=gt_dim)
    jax.block_until_ready((ch, pred, loss, reg))

    # Tight check vs a reference using the same bf16-MXU numerics.
    ch_r, pred_r, loss_r, reg_r = reference_forward_bf16(history, context, params)
    assert jnp.allclose(ch, ch_r, atol=2e-3, rtol=2e-3), "ch mismatch (bf16 ref)"
    assert jnp.allclose(pred, pred_r, atol=2e-3, rtol=2e-3), "pred mismatch (bf16 ref)"
    assert jnp.allclose(loss, loss_r, atol=2e-3, rtol=2e-3), "loss mismatch (bf16 ref)"
    assert jnp.allclose(reg, reg_r, atol=2e-3, rtol=2e-3), "reg mismatch (bf16 ref)"

    # Loose check vs exact-f32 math (differences = bf16 matmul rounding only).
    ch_f, pred_f, loss_f, reg_f = reference_forward_f32(history, context, params)
    assert jnp.allclose(ch, ch_f, atol=1e-1, rtol=1e-1), "ch mismatch (f32 ref)"
    assert jnp.allclose(pred, pred_f, atol=1e-1, rtol=1e-1), "pred mismatch (f32 ref)"
    assert jnp.allclose(loss, loss_f, atol=1e-1, rtol=1e-1), "loss mismatch (f32 ref)"
    assert jnp.allclose(reg, reg_f, atol=2e-1, rtol=1e-1), "reg mismatch (f32 ref)"


if __name__ == "__main__":
    # Shapes implied by the module:
    #   obs_dim=8, action_dim=4, len_history=4 -> history dim = 48
    #   context_hidden_dim=32, gt_context_dim=6, batch=8
    obs_dim, action_dim, len_history = 8, 4, 4
    hidden_dim, gt_context_dim, batch = 32, 6, 8
    in_dim = (obs_dim + action_dim) * len_history

    key = jax.random.PRNGKey(0)
    key, k_params, k_small, k_big = jax.random.split(key, 4)
    params = init_params(k_params, in_dim, hidden_dim, gt_context_dim)
    prepped = prepare_params(params)      # one-time bf16 cast + pad + bias pack

    # Small batch (grid = 1 tile).
    _run_and_check(k_small, batch, in_dim, hidden_dim, gt_context_dim, params, prepped)
    # Larger batch (grid = 2 tiles, exercises batch masking of padded rows).
    _run_and_check(k_big, 300, in_dim, hidden_dim, gt_context_dim, params, prepped)

    print("KERNEL_OK")
</pallas_src>

<mosaic_0001>
module attributes {stable_mosaic.version = 11 : i64} {
  func.func @kernel(%arg0: i32, %arg1: memref<8x48xf32, #tpu.memory_space<vmem>>, %arg2: memref<8x128xf32, #tpu.memory_space<vmem>>, %arg3: memref<48x256xbf16, #tpu.memory_space<vmem>>, %arg4: memref<256x128xbf16, #tpu.memory_space<vmem>>, %arg5: memref<128x128xbf16, #tpu.memory_space<vmem>>, %arg6: memref<128x128xbf16, #tpu.memory_space<vmem>>, %arg7: memref<128x128xbf16, #tpu.memory_space<vmem>>, %arg8: memref<128x128xbf16, #tpu.memory_space<vmem>>, %arg9: memref<1x896xf32, #tpu.memory_space<vmem>>, %arg10: memref<8x256xf32, #tpu.memory_space<vmem>>, %arg11: memref<1x8x128xf32, #tpu.memory_space<vmem>>) attributes {dimension_semantics = [#tpu.dimension_semantics<parallel>], iteration_bounds = array<i64: 1>, scalar_prefetch = 0 : i64, scratch_operands = 0 : i64, tpu.core_type = #tpu.core_type<tc>, window_params = [{transform_indices = @transform_0, window_bounds = array<i64: 8, 48>}, {transform_indices = @transform_1, window_bounds = array<i64: 8, 128>}, {pipeline_mode = #tpu.pipeline_mode<synchronous>, transform_indices = @transform_2, window_bounds = array<i64: 48, 256>}, {pipeline_mode = #tpu.pipeline_mode<synchronous>, transform_indices = @transform_3, window_bounds = array<i64: 256, 128>}, {pipeline_mode = #tpu.pipeline_mode<synchronous>, transform_indices = @transform_4, window_bounds = array<i64: 128, 128>}, {pipeline_mode = #tpu.pipeline_mode<synchronous>, transform_indices = @transform_5, window_bounds = array<i64: 128, 128>}, {pipeline_mode = #tpu.pipeline_mode<synchronous>, transform_indices = @transform_6, window_bounds = array<i64: 128, 128>}, {pipeline_mode = #tpu.pipeline_mode<synchronous>, transform_indices = @transform_7, window_bounds = array<i64: 128, 128>}, {pipeline_mode = #tpu.pipeline_mode<synchronous>, transform_indices = @transform_8, window_bounds = array<i64: 1, 896>}, {transform_indices = @transform_9, window_bounds = array<i64: 8, 256>}, {transform_indices = @transform_10, window_bounds = array<i64: 1, 8, 128>}]} {
    %c0 = arith.constant 0 : index
    %c0_0 = arith.constant 0 : index
    %0 = vector.load %arg1[%c0, %c0_0] : memref<8x48xf32, #tpu.memory_space<vmem>>, vector<8x48xf32>
    %1 = arith.truncf %0 : vector<8x48xf32> to vector<8x48xbf16>
    %c0_1 = arith.constant 0 : index
    %c0_2 = arith.constant 0 : index
    %2 = vector.load %arg3[%c0_1, %c0_2] : memref<48x256xbf16, #tpu.memory_space<vmem>>, vector<48x256xbf16>
    %cst = arith.constant dense<0.000000e+00> : vector<8x256xf32>
    %3 = tpu.matmul %1, %2, %cst {dimension_numbers = #tpu.dot_dimension_numbers<[1], [0], [0], [1], [0, 0, 1, 1], [], []>} : vector<8x48xbf16>, vector<48x256xbf16>, vector<8x256xf32> -> vector<8x256xf32>
    %c0_3 = arith.constant 0 : index
    %c0_4 = arith.constant 0 : index
    %4 = vector.load %arg9[%c0_3, %c0_4] : memref<1x896xf32, #tpu.memory_space<vmem>>, vector<1x256xf32>
    %5 = vector.broadcast %4 : vector<1x256xf32> to vector<8x256xf32>
    %6 = arith.addf %3, %5 : vector<8x256xf32>
    %7 = math.tanh %6 : vector<8x256xf32>
    %8 = arith.truncf %7 : vector<8x256xf32> to vector<8x256xbf16>
    %c0_5 = arith.constant 0 : index
    %c0_6 = arith.constant 0 : index
    %9 = vector.load %arg4[%c0_5, %c0_6] : memref<256x128xbf16, #tpu.memory_space<vmem>>, vector<256x128xbf16>
    %cst_7 = arith.constant dense<0.000000e+00> : vector<8x128xf32>
    %10 = tpu.matmul %8, %9, %cst_7 {dimension_numbers = #tpu.dot_dimension_numbers<[1], [0], [0], [1], [0, 0, 1, 1], [], []>} : vector<8x256xbf16>, vector<256x128xbf16>, vector<8x128xf32> -> vector<8x128xf32>
    %c0_8 = arith.constant 0 : index
    %c256 = arith.constant 256 : index
    %11 = vector.load %arg9[%c0_8, %c256] : memref<1x896xf32, #tpu.memory_space<vmem>>, vector<1x128xf32>
    %12 = vector.broadcast %11 : vector<1x128xf32> to vector<8x128xf32>
    %13 = arith.addf %10, %12 : vector<8x128xf32>
    %14 = math.tanh %13 : vector<8x128xf32>
    %15 = arith.truncf %14 : vector<8x128xf32> to vector<8x128xbf16>
    %c0_9 = arith.constant 0 : index
    %c0_10 = arith.constant 0 : index
    %16 = vector.load %arg5[%c0_9, %c0_10] : memref<128x128xbf16, #tpu.memory_space<vmem>>, vector<128x128xbf16>
    %cst_11 = arith.constant dense<0.000000e+00> : vector<8x128xf32>
    %17 = tpu.matmul %15, %16, %cst_11 {dimension_numbers = #tpu.dot_dimension_numbers<[1], [0], [0], [1], [0, 0, 1, 1], [], []>} : vector<8x128xbf16>, vector<128x128xbf16>, vector<8x128xf32> -> vector<8x128xf32>
    %c0_12 = arith.constant 0 : index
    %c384 = arith.constant 384 : index
    %18 = vector.load %arg9[%c0_12, %c384] : memref<1x896xf32, #tpu.memory_space<vmem>>, vector<1x128xf32>
    %19 = vector.broadcast %18 : vector<1x128xf32> to vector<8x128xf32>
    %20 = arith.addf %17, %19 : vector<8x128xf32>
    %21 = math.tanh %20 : vector<8x128xf32>
    %22 = arith.truncf %21 : vector<8x128xf32> to vector<8x128xbf16>
    %c0_13 = arith.constant 0 : index
    %c0_14 = arith.constant 0 : index
    %23 = vector.load %arg6[%c0_13, %c0_14] : memref<128x128xbf16, #tpu.memory_space<vmem>>, vector<128x128xbf16>
    %cst_15 = arith.constant dense<0.000000e+00> : vector<8x128xf32>
    %24 = tpu.matmul %22, %23, %cst_15 {dimension_numbers = #tpu.dot_dimension_numbers<[1], [0], [0], [1], [0, 0, 1, 1], [], []>} : vector<8x128xbf16>, vector<128x128xbf16>, vector<8x128xf32> -> vector<8x128xf32>
    %c0_16 = arith.constant 0 : index
    %c512 = arith.constant 512 : index
    %25 = vector.load %arg9[%c0_16, %c512] : memref<1x896xf32, #tpu.memory_space<vmem>>, vector<1x128xf32>
    %26 = vector.broadcast %25 : vector<1x128xf32> to vector<8x128xf32>
    %27 = arith.addf %24, %26 : vector<8x128xf32>
    %28 = arith.truncf %27 : vector<8x128xf32> to vector<8x128xbf16>
    %c0_17 = arith.constant 0 : index
    %c0_18 = arith.constant 0 : index
    %29 = vector.load %arg7[%c0_17, %c0_18] : memref<128x128xbf16, #tpu.memory_space<vmem>>, vector<128x128xbf16>
    %cst_19 = arith.constant dense<0.000000e+00> : vector<8x128xf32>
    %30 = tpu.matmul %28, %29, %cst_19 {dimension_numbers = #tpu.dot_dimension_numbers<[1], [0], [0], [1], [0, 0, 1, 1], [], []>} : vector<8x128xbf16>, vector<128x128xbf16>, vector<8x128xf32> -> vector<8x128xf32>
    %c0_20 = arith.constant 0 : index
    %c640 = arith.constant 640 : index
    %31 = vector.load %arg9[%c0_20, %c640] : memref<1x896xf32, #tpu.memory_space<vmem>>, vector<1x128xf32>
    %32 = vector.broadcast %31 : vector<1x128xf32> to vector<8x128xf32>
    %33 = arith.addf %30, %32 : vector<8x128xf32>
    %34 = math.tanh %33 : vector<8x128xf32>
    %35 = arith.truncf %34 : vector<8x128xf32> to vector<8x128xbf16>
    %c0_21 = arith.constant 0 : index
    %c0_22 = arith.constant 0 : index
    %36 = vector.load %arg8[%c0_21, %c0_22] : memref<128x128xbf16, #tpu.memory_space<vmem>>, vector<128x128xbf16>
    %cst_23 = arith.constant dense<0.000000e+00> : vector<8x128xf32>
    %37 = tpu.matmul %35, %36, %cst_23 {dimension_numbers = #tpu.dot_dimension_numbers<[1], [0], [0], [1], [0, 0, 1, 1], [], []>} : vector<8x128xbf16>, vector<128x128xbf16>, vector<8x128xf32> -> vector<8x128xf32>
    %c0_24 = arith.constant 0 : index
    %c768 = arith.constant 768 : index
    %38 = vector.load %arg9[%c0_24, %c768] : memref<1x896xf32, #tpu.memory_space<vmem>>, vector<1x128xf32>
    %39 = vector.broadcast %38 : vector<1x128xf32> to vector<8x128xf32>
    %40 = arith.addf %37, %39 : vector<8x128xf32>
    %41 = tpu.iota {dimensions = array<i32: 0>} : vector<8x1xi32>
    %c8_i32 = arith.constant 8 : i32
    %42 = arith.muli %arg0, %c8_i32 : i32
    %43 = vector.broadcast %42 : i32 to vector<8x1xi32>
    %44 = arith.addi %43, %41 : vector<8x1xi32>
    %c8_i32_25 = arith.constant 8 : i32
    %45 = vector.broadcast %c8_i32_25 : i32 to vector<8x1xi32>
    %46 = arith.cmpi slt, %44, %45 : vector<8x1xi32>
    %47 = arith.extui %46 : vector<8x1xi1> to vector<8x1xi32>
    %48 = arith.sitofp %47 : vector<8x1xi32> to vector<8x1xf32>
    %c0_26 = arith.constant 0 : index
    %c0_27 = arith.constant 0 : index
    %49 = vector.load %arg2[%c0_26, %c0_27] : memref<8x128xf32, #tpu.memory_space<vmem>>, vector<8x128xf32>
    %50 = arith.subf %40, %49 : vector<8x128xf32>
    %51 = vector.broadcast %48 : vector<8x1xf32> to vector<8x128xf32>
    %52 = arith.mulf %51, %50 : vector<8x128xf32>
    %53 = arith.mulf %52, %50 : vector<8x128xf32>
    %54 = vector.shape_cast %53 : vector<8x128xf32> to vector<1x8x128xf32>
    %cst_28 = arith.constant dense<0.000000e+00> : vector<1xf32>
    %55 = vector.multi_reduction <add>, %54, %cst_28 [1, 2] : vector<1x8x128xf32> to vector<1xf32>
    %56 = vector.shape_cast %55 : vector<1xf32> to vector<1x1x1xf32>
    %57 = vector.extract %56[0, 0, 0] : f32 from vector<1x1x1xf32>
    %58 = vector.broadcast %48 : vector<8x1xf32> to vector<8x128xf32>
    %59 = arith.mulf %58, %27 : vector<8x128xf32>
    %60 = arith.mulf %59, %27 : vector<8x128xf32>
    %61 = vector.shape_cast %60 : vector<8x128xf32> to vector<1x8x128xf32>
    %cst_29 = arith.constant dense<0.000000e+00> : vector<1xf32>
    %62 = vector.multi_reduction <add>, %61, %cst_29 [1, 2] : vector<1x8x128xf32> to vector<1xf32>
    %63 = vector.shape_cast %62 : vector<1xf32> to vector<1x1x1xf32>
    %64 = vector.extract %63[0, 0, 0] : f32 from vector<1x1x1xf32>
    %65 = tpu.concatenate %27, %40 in 1 : vector<8x128xf32>, vector<8x128xf32> -> vector<8x256xf32>
    %c0_30 = arith.constant 0 : index
    %c0_31 = arith.constant 0 : index
    %66 = vector.load %arg10[%c0_30, %c0_31] : memref<8x256xf32, #tpu.memory_space<vmem>>, vector<8x256xf32>
    tpu.vector_store %arg10[%c0_30, %c0_31], %65 {strides = array<i32>} : memref<8x256xf32, #tpu.memory_space<vmem>>, vector<8x256xf32>,
    %67 = tpu.iota {dimensions = array<i32: 1>} : vector<8x128xi32>
    %c0_i32 = arith.constant 0 : i32
    %68 = vector.broadcast %c0_i32 : i32 to vector<8x128xi32>
    %69 = arith.cmpi eq, %67, %68 : vector<8x128xi32>
    %c1_i32 = arith.constant 1 : i32
    %70 = vector.broadcast %c1_i32 : i32 to vector<8x128xi32>
    %71 = arith.cmpi eq, %67, %70 : vector<8x128xi32>
    %cst_32 = arith.constant 0.000000e+00 : f32
    %72 = vector.broadcast %64 : f32 to vector<8x128xf32>
    %73 = vector.broadcast %cst_32 : f32 to vector<8x128xf32>
    %74 = arith.select %71, %72, %73 : vector<8x128xi1>, vector<8x128xf32>
    %75 = vector.broadcast %57 : f32 to vector<8x128xf32>
    %76 = arith.select %69, %75, %74 : vector<8x128xi1>, vector<8x128xf32>
    %77 = vector.shape_cast %76 : vector<8x128xf32> to vector<1x8x128xf32>
    %c0_33 = arith.constant 0 : index
    %c0_34 = arith.constant 0 : index
    %c0_35 = arith.constant 0 : index
    %78 = vector.load %arg11[%c0_33, %c0_34, %c0_35] : memref<1x8x128xf32, #tpu.memory_space<vmem>>, vector<1x8x128xf32>
    tpu.vector_store %arg11[%c0_33, %c0_34, %c0_35], %77 {strides = array<i32>} : memref<1x8x128xf32, #tpu.memory_space<vmem>>, vector<1x8x128xf32>,
    return
  }
  func.func @transform_0(%arg0: i32) -> (i32, i32) {
    %c0_i32 = arith.constant 0 : i32
    %c0_i32_0 = arith.constant 0 : i32
    return %arg0, %c0_i32 : i32, i32
  }
  func.func @transform_1(%arg0: i32) -> (i32, i32) {
    %c0_i32 = arith.constant 0 : i32
    %c0_i32_0 = arith.constant 0 : i32
    return %arg0, %c0_i32 : i32, i32
  }
  func.func @transform_2(%arg0: i32) -> (i32, i32) {
    %c0_i32 = arith.constant 0 : i32
    %c0_i32_0 = arith.constant 0 : i32
    %c0_i32_1 = arith.constant 0 : i32
    return %c0_i32, %c0_i32_0 : i32, i32
  }
  func.func @transform_3(%arg0: i32) -> (i32, i32) {
    %c0_i32 = arith.constant 0 : i32
    %c0_i32_0 = arith.constant 0 : i32
    %c0_i32_1 = arith.constant 0 : i32
    return %c0_i32, %c0_i32_0 : i32, i32
  }
  func.func @transform_4(%arg0: i32) -> (i32, i32) {
    %c0_i32 = arith.constant 0 : i32
    %c0_i32_0 = arith.constant 0 : i32
    %c0_i32_1 = arith.constant 0 : i32
    return %c0_i32, %c0_i32_0 : i32, i32
  }
  func.func @transform_5(%arg0: i32) -> (i32, i32) {
    %c0_i32 = arith.constant 0 : i32
    %c0_i32_0 = arith.constant 0 : i32
    %c0_i32_1 = arith.constant 0 : i32
    return %c0_i32, %c0_i32_0 : i32, i32
  }
  func.func @transform_6(%arg0: i32) -> (i32, i32) {
    %c0_i32 = arith.constant 0 : i32
    %c0_i32_0 = arith.constant 0 : i32
    %c0_i32_1 = arith.constant 0 : i32
    return %c0_i32, %c0_i32_0 : i32, i32
  }
  func.func @transform_7(%arg0: i32) -> (i32, i32) {
    %c0_i32 = arith.constant 0 : i32
    %c0_i32_0 = arith.constant 0 : i32
    %c0_i32_1 = arith.constant 0 : i32
    return %c0_i32, %c0_i32_0 : i32, i32
  }
  func.func @transform_8(%arg0: i32) -> (i32, i32) {
    %c0_i32 = arith.constant 0 : i32
    %c0_i32_0 = arith.constant 0 : i32
    %c0_i32_1 = arith.constant 0 : i32
    return %c0_i32, %c0_i32_0 : i32, i32
  }
  func.func @transform_9(%arg0: i32) -> (i32, i32) {
    %c0_i32 = arith.constant 0 : i32
    %c0_i32_0 = arith.constant 0 : i32
    return %arg0, %c0_i32 : i32, i32
  }
  func.func @transform_10(%arg0: i32) -> (i32, i32, i32) {
    %c0_i32 = arith.constant 0 : i32
    %c0_i32_0 = arith.constant 0 : i32
    %c0_i32_1 = arith.constant 0 : i32
    return %arg0, %c0_i32, %c0_i32_0 : i32, i32, i32
  }
}

</mosaic_0001>

<llo_original>
// kernel: context_encoder_forward.1
$region0: #{context_encoder_forward.1}
  #allocation0 [shape = 'u32[]', space=smem, size = 0x4, offset = 0x4, fixed_abs, tag = 'smem constant byte address 0x4 - core index']
  #allocation1 [shape = 'u32[144,128]{1,0:T(1,128)}', space=vmem, size = 0x12000, scoped, tag = 'internal scratch']
  %s0 = inlined_call_operand.vmem [shape: f32[8,48], index: 0, kind: input, shape index: {}]
  %s1 = inlined_call_operand.vmem [shape: f32[8,128], index: 1, kind: input, shape index: {}]
  %s2 = inlined_call_operand.hbm [shape: bf16[48,256], index: 2, kind: input, shape index: {}]
  %s3 = inlined_call_operand.hbm [shape: bf16[256,128], index: 3, kind: input, shape index: {}]
  %s4 = inlined_call_operand.hbm [shape: bf16[128,128], index: 4, kind: input, shape index: {}]
  %s5 = inlined_call_operand.hbm [shape: bf16[128,128], index: 5, kind: input, shape index: {}]
  %s6 = inlined_call_operand.hbm [shape: bf16[128,128], index: 6, kind: input, shape index: {}]
  %s7 = inlined_call_operand.hbm [shape: bf16[128,128], index: 7, kind: input, shape index: {}]
  %s8 = inlined_call_operand.vmem [shape: f32[1,896], index: 8, kind: input, shape index: {}]
  %s9 = inlined_call_operand.vmem [shape: f32[8,256], index: 9, kind: output, shape index: {0}]
  %s10 = inlined_call_operand.vmem [shape: f32[1,8,128], index: 10, kind: output, shape index: {1}]
  %11 = xla_tuple %s9, %s10
  %s12 = sld [smem:[#allocation0]]
  $region78: #{context_encoder_forward.1} parent=0
    _
  %s14 = ssub.s32 1, %s12
  %s15 = scalar_select 0, %s14, %s12
  $region1: #{context_encoder_forward.1} parent=0
    #allocation2 [shape = 'u8[24576]{0}', space=vmem, size = 0x6000, scoped, tag = 'input window, operand 2, single buffered']
    #allocation3 [shape = 's32[1]{0}', space=sflag, size = 0x4, scoped, tag = 'scoped memory for context_encoder_forward.1']
    #allocation4 [shape = 'u8[65536]{0}', space=vmem, size = 0x10000, scoped, tag = 'input window, operand 3, single buffered']
    #allocation5 [shape = 's32[1]{0}', space=sflag, size = 0x4, scoped, tag = 'scoped memory for context_encoder_forward.1']
    #allocation6 [shape = 'u8[32768]{0}', space=vmem, size = 0x8000, scoped, tag = 'input window, operand 4, single buffered']
    #allocation7 [shape = 'u8[32768]{0}', space=vmem, size = 0x8000, scoped, tag = 'input window, operand 5, single buffered']
    #allocation8 [shape = 's32[1]{0}', space=sflag, size = 0x4, scoped, tag = 'scoped memory for context_encoder_forward.1']
    #allocation9 [shape = 'u8[32768]{0}', space=vmem, size = 0x8000, scoped, tag = 'input window, operand 6, single buffered']
    #allocation10 [shape = 'u8[32768]{0}', space=vmem, size = 0x8000, scoped, tag = 'input window, operand 7, single buffered']
    #allocation11 [shape = 's32[1]{0}', space=sflag, size = 0x4, scoped, tag = 'scoped memory for context_encoder_forward.1']
    %16 = vsyncpa [#allocation3], 0
    %17 = vsyncpa [#allocation5], 0
    %18 = vsyncpa [#allocation8], 0
    %19 = vsyncpa [#allocation11], 0
    // Predicated region
    $region2: #{context_encoder_forward.1} parent=1 // pred_check
      _
    $region3: #{context_encoder_forward.1} parent=1 // pred_check_branch
      %21 = sbr.rel (0) target = $region5
    $region4: #{context_encoder_forward.1} parent=1 // pred_region
      _
    $region5: #{context_encoder_forward.1} parent=1 // pred_fallthru
      _
    // Predicated region
    $region6: #{context_encoder_forward.1} parent=1 // pred_check
      _
    $region7: #{context_encoder_forward.1} parent=1 // pred_check_branch
      %23 = sbr.rel (0) target = $region9
    $region8: #{context_encoder_forward.1} parent=1 // pred_region
      _
    $region9: #{context_encoder_forward.1} parent=1 // pred_fallthru
      _
    // Predicated region
    $region10: #{context_encoder_forward.1} parent=1 // pred_check
      _
    $region11: #{context_encoder_forward.1} parent=1 // pred_check_branch
      %25 = sbr.rel (0) target = $region13
    $region12: #{context_encoder_forward.1} parent=1 // pred_region
      %s27 = ssub.s32 768, 768
      %28 = vsyncadd [#allocation3], %s27
      %s29 = sshll.u32 [#allocation2], 4
      %s30 = int_to_ptr.vmem [resolvable:$true] %s29
      %35 = dma.hbm_to_vmem [thread:$0]  %s2, 768, %s30, [#allocation3], 128, 128, 8
    $region13: #{context_encoder_forward.1} parent=1 // pred_fallthru
      _
    // Predicated region
    $region14: #{context_encoder_forward.1} parent=1 // pred_check
      _
    $region15: #{context_encoder_forward.1} parent=1 // pred_check_branch
      %37 = sbr.rel (0) target = $region17
    $region16: #{context_encoder_forward.1} parent=1 // pred_region
      %s39 = ssub.s32 2048, 2048
      %40 = vsyncadd [#allocation5], %s39
      %s41 = sshll.u32 [#allocation4], 4
      %s42 = int_to_ptr.vmem [resolvable:$true] %s41
      %47 = dma.hbm_to_vmem [thread:$0]  %s3, 2048, %s42, [#allocation5], 64, 64, 4
    $region17: #{context_encoder_forward.1} parent=1 // pred_fallthru
      _
    // Predicated region
    $region18: #{context_encoder_forward.1} parent=1 // pred_check
      _
    $region19: #{context_encoder_forward.1} parent=1 // pred_check_branch
      %49 = sbr.rel (0) target = $region21
    $region20: #{context_encoder_forward.1} parent=1 // pred_region
      %s51 = ssub.s32 1024, 1024
      %52 = vsyncadd [#allocation5], %s51
      %s53 = sshll.u32 [#allocation6], 4
      %s54 = int_to_ptr.vmem [resolvable:$true] %s53
      %59 = dma.hbm_to_vmem [thread:$0]  %s4, 1024, %s54, [#allocation5], 64, 64, 4
    $region21: #{context_encoder_forward.1} parent=1 // pred_fallthru
      _
    // Predicated region
    $region22: #{context_encoder_forward.1} parent=1 // pred_check
      _
    $region23: #{context_encoder_forward.1} parent=1 // pred_check_branch
      %61 = sbr.rel (0) target = $region25
    $region24: #{context_encoder_forward.1} parent=1 // pred_region
      %s63 = ssub.s32 1024, 1024
      %64 = vsyncadd [#allocation8], %s63
      %s65 = sshll.u32 [#allocation7], 4
      %s66 = int_to_ptr.vmem [resolvable:$true] %s65
      %71 = dma.hbm_to_vmem [thread:$0]  %s5, 1024, %s66, [#allocation8], 64, 64, 4
    $region25: #{context_encoder_forward.1} parent=1 // pred_fallthru
      _
    // Predicated region
    $region26: #{context_encoder_forward.1} parent=1 // pred_check
      _
    $region27: #{context_encoder_forward.1} parent=1 // pred_check_branch
      %73 = sbr.rel (0) target = $region29
    $region28: #{context_encoder_forward.1} parent=1 // pred_region
      %s75 = ssub.s32 1024, 1024
      %76 = vsyncadd [#allocation8], %s75
      %s77 = sshll.u32 [#allocation9], 4
      %s78 = int_to_ptr.vmem [resolvable:$true] %s77
      %83 = dma.hbm_to_vmem [thread:$0]  %s6, 1024, %s78, [#allocation8], 64, 64, 4
    $region29: #{context_encoder_forward.1} parent=1 // pred_fallthru
      _
    // Predicated region
    $region30: #{context_encoder_forward.1} parent=1 // pred_check
      _
    $region31: #{context_encoder_forward.1} parent=1 // pred_check_branch
      %85 = sbr.rel (0) target = $region33
    $region32: #{context_encoder_forward.1} parent=1 // pred_region
      %s87 = ssub.s32 1024, 1024
      %88 = vsyncadd [#allocation11], %s87
      %s89 = sshll.u32 [#allocation10], 4
      %s90 = int_to_ptr.vmem [resolvable:$true] %s89
      %95 = dma.hbm_to_vmem [thread:$0]  %s7, 1024, %s90, [#allocation11], 64, 64, 4
    $region33: #{context_encoder_forward.1} parent=1 // pred_fallthru
      _
    // Predicated region
    $region34: #{context_encoder_forward.1} parent=1 // pred_check
      _
    $region35: #{context_encoder_forward.1} parent=1 // pred_check_branch
      %97 = sbr.rel (0) target = $region37
    $region36: #{context_encoder_forward.1} parent=1 // pred_region
      _
    $region37: #{context_encoder_forward.1} parent=1 // pred_fallthru
      _
    // Predicated region
    $region38: #{context_encoder_forward.1} parent=1 // pred_check
      _
    $region39: #{context_encoder_forward.1} parent=1 // pred_check_branch
      %99 = sbr.rel (0) target = $region41
    $region40: #{context_encoder_forward.1} parent=1 // pred_region
      %100 = dma.done [#allocation3], 768
    $region41: #{context_encoder_forward.1} parent=1 // pred_fallthru
      _
    // Predicated region
    $region42: #{context_encoder_forward.1} parent=1 // pred_check
      _
    $region43: #{context_encoder_forward.1} parent=1 // pred_check_branch
      %102 = sbr.rel (0) target = $region45
    $region44: #{context_encoder_forward.1} parent=1 // pred_region
      %103 = dma.done [#allocation5], 2048
    $region45: #{context_encoder_forward.1} parent=1 // pred_fallthru
      _
    // Predicated region
    $region46: #{context_encoder_forward.1} parent=1 // pred_check
      _
    $region47: #{context_encoder_forward.1} parent=1 // pred_check_branch
      %105 = sbr.rel (0) target = $region49
    $region48: #{context_encoder_forward.1} parent=1 // pred_region
      %106 = dma.done [#allocation5], 1024
    $region49: #{context_encoder_forward.1} parent=1 // pred_fallthru
      _
    // Predicated region
    $region50: #{context_encoder_forward.1} parent=1 // pred_check
      _
    $region51: #{context_encoder_forward.1} parent=1 // pred_check_branch
      %108 = sbr.rel (0) target = $region53
    $region52: #{context_encoder_forward.1} parent=1 // pred_region
      %109 = dma.done [#allocation8], 1024
    $region53: #{context_encoder_forward.1} parent=1 // pred_fallthru
      _
    // Predicated region
    $region54: #{context_encoder_forward.1} parent=1 // pred_check
      _
    $region55: #{context_encoder_forward.1} parent=1 // pred_check_branch
      %111 = sbr.rel (0) target = $region57
    $region56: #{context_encoder_forward.1} parent=1 // pred_region
      %112 = dma.done [#allocation8], 1024
    $region57: #{context_encoder_forward.1} parent=1 // pred_fallthru
      _
    // Predicated region
    $region58: #{context_encoder_forward.1} parent=1 // pred_check
      _
    $region59: #{context_encoder_forward.1} parent=1 // pred_check_branch
      %114 = sbr.rel (0) target = $region61
    $region60: #{context_encoder_forward.1} parent=1 // pred_region
      %115 = dma.done [#allocation11], 1024
    $region61: #{context_encoder_forward.1} parent=1 // pred_fallthru
      _
    %v117 = vld [vmem:[%s0] sm:$0xff]
    %v118 = vpack.c.bf16 %v117, %v117
    %v119 = vld [vmem:[#allocation2] sm:$0xff]
    %v120 = vld [vmem:[#allocation2 + $0x8] sm:$0xff]
    %v121 = vld [vmem:[#allocation2 + $0x10] sm:$0xff]
    %v122 = vld [vmem:[#allocation2 + $0x18] sm:$0xff]
    %v123 = vld [vmem:[#allocation2 + $0x20] sm:$0xff]
    %v124 = vld [vmem:[#allocation2 + $0x28] sm:$0xff]
    %v125 = vld [vmem:[%s8] sm:$0x3]
    %v127 = vlaneseq
    %v128 = vshrl.u32 %v127, 7
    %v129 = vsub.s32 0, %v128
    %v130 = vrot.slane %v125, %v129
    %v131 = vlaneseq
    %v132 = vshrl.u32 %v131, 7
    %v133 = vsub.s32 1, %v132
    %v134 = vrot.slane %v125, %v133
    %v143 = vunpack.c.l.b16 %v119
    %v144 = vunpack.c.h.b16 %v119
    %v145 = vunpack.c.l.b16 %v120
    %v146 = vunpack.c.h.b16 %v120
    %v147 = vunpack.c.l.b16 %v121
    %v148 = vunpack.c.h.b16 %v121
    %v149 = vunpack.c.l.b16 %v122
    %v150 = vunpack.c.h.b16 %v122
    %v151 = vunpack.c.l.b16 %v123
    %v152 = vunpack.c.h.b16 %v123
    %v153 = vunpack.c.l.b16 %v124
    %v154 = vunpack.c.h.b16 %v124
    %v155 = vpack.c.b16 %v145, %v143
    %v156 = vpack.c.b16 %v146, %v144
    %v157 = vpack.c.b16 %v149, %v147
    %v158 = vpack.c.b16 %v150, %v148
    %v159 = vpack.c.b16 %v153, %v151
    %v160 = vpack.c.b16 %v154, %v152
    %vm167 = vcmask 392192
    %v169 = vsel %vm167, %v118, 0
    %171 = vmatprep.subr.bf16.mxu0 0
    %172 = vmatpush1.bf16.msra.mxu0 0
    %173 = vmatprep.subr.bf16.mxu0 0
    %174 = vmatpush1.bf16.msra.mxu0 0
    %175 = vmatprep.subr.bf16.mxu0 0
    %176 = vmatpush1.bf16.msra.mxu0 0
    %177 = vmatprep.subr.bf16.mxu0 0
    %178 = vmatpush1.bf16.msra.mxu0 0
    %179 = vmatprep.subr.bf16.mxu0 0
    %180 = vmatpush1.bf16.msra.mxu0 0
    %181 = vmatprep.subr.bf16.mxu0 %v160
    %182 = vmatpush1.bf16.msra.mxu0 %v159
    %183 = vmatprep.subr.bf16.mxu0 %v158
    %184 = vmatpush1.bf16.msra.mxu0 %v157
    %185 = vmatprep.subr.bf16.mxu0 %v156
    %186 = vmatpush1.bf16.msra.mxu0 %v155
    %187 = vmatprep.subr.bf16.mxu0 0
    %188 = vmatpush2.bf16.msra.mxu0 0
    %189 = vmatprep.subr.bf16.mxu0 0
    %190 = vmatpush2.bf16.msra.mxu0 0
    %191 = vmatprep.subr.bf16.mxu0 0
    %192 = vmatpush2.bf16.msra.mxu0 0
    %193 = vmatprep.subr.bf16.mxu0 0
    %194 = vmatpush2.bf16.msra.mxu0 0
    %195 = vmatprep.subr.bf16.mxu0 0
    %196 = vmatpush2.bf16.msra.mxu0 0
    %197 = vmatprep.subr.bf16.mxu0 0
    %198 = vmatpush2.bf16.msra.mxu0 0
    %199 = vmatprep.subr.bf16.mxu0 0
    %200 = vmatpush2.bf16.msra.mxu0 0
    %201 = vmatprep.subr.bf16.mxu0 0
    %202 = vmatpush2.bf16.msra.mxu0 0
    %203 = vmatprep.mubr.bf16.mxu0 0
    %204 = vmatmul.mubr.bf16.gmra.mxu0 %v169
    %v205 = vpop.f32.mrf.mxu0
    %v206 = vadd.f32 %v130, %v205
    %v207 = vpop.f32.mrf.mxu0
    %v208 = vadd.f32 %v134, %v207
    %v209 = vpop.f32.mrf.mxu0
    %v210 = vpop.f32.mrf.mxu0
    %211 = vdwg.mxu0
    %v212 = vtanh.pop %v206
    %v213 = vtanh.pop %v208
    %v214 = vpack.c.bf16 %v212, %v212
    %v215 = vpack.c.bf16 %v213, %v213
    %v216 = vld [vmem:[#allocation4] sm:$0xf]
    %v217 = vld [vmem:[#allocation4 + $0x4] sm:$0xf]
    %v218 = vld [vmem:[#allocation4 + $0x8] sm:$0xf]
    %v219 = vld [vmem:[#allocation4 + $0xc] sm:$0xf]
    %v220 = vld [vmem:[#allocation4 + $0x10] sm:$0xf]
    %v221 = vld [vmem:[#allocation4 + $0x14] sm:$0xf]
    %v222 = vld [vmem:[#allocation4 + $0x18] sm:$0xf]
    %v223 = vld [vmem:[#allocation4 + $0x1c] sm:$0xf]
    %v224 = vld [vmem:[#allocation4 + $0x20] sm:$0xf]
    %v225 = vld [vmem:[#allocation4 + $0x24] sm:$0xf]
    %v226 = vld [vmem:[#allocation4 + $0x28] sm:$0xf]
    %v227 = vld [vmem:[#allocation4 + $0x2c] sm:$0xf]
    %v228 = vld [vmem:[#allocation4 + $0x30] sm:$0xf]
    %v229 = vld [vmem:[#allocation4 + $0x34] sm:$0xf]
    %v230 = vld [vmem:[#allocation4 + $0x38] sm:$0xf]
    %v231 = vld [vmem:[#allocation4 + $0x3c] sm:$0xf]
    %v232 = vld [vmem:[#allocation4 + $0x40] sm:$0xf]
    %v233 = vld [vmem:[#allocation4 + $0x44] sm:$0xf]
    %v234 = vld [vmem:[#allocation4 + $0x48] sm:$0xf]
    %v235 = vld [vmem:[#allocation4 + $0x4c] sm:$0xf]
    %v236 = vld [vmem:[#allocation4 + $0x50] sm:$0xf]
    %v237 = vld [vmem:[#allocation4 + $0x54] sm:$0xf]
    %v238 = vld [vmem:[#allocation4 + $0x58] sm:$0xf]
    %v239 = vld [vmem:[#allocation4 + $0x5c] sm:$0xf]
    %v240 = vld [vmem:[#allocation4 + $0x60] sm:$0xf]
    %v241 = vld [vmem:[#allocation4 + $0x64] sm:$0xf]
    %v242 = vld [vmem:[#allocation4 + $0x68] sm:$0xf]
    %v243 = vld [vmem:[#allocation4 + $0x6c] sm:$0xf]
    %v244 = vld [vmem:[#allocation4 + $0x70] sm:$0xf]
    %v245 = vld [vmem:[#allocation4 + $0x74] sm:$0xf]
    %v246 = vld [vmem:[#allocation4 + $0x78] sm:$0xf]
    %v247 = vld [vmem:[#allocation4 + $0x7c] sm:$0xf]
    %v248 = vld [vmem:[%s8 + $0x2] sm:$0x1]
    %v250 = vlaneseq
    %v251 = vshrl.u32 %v250, 7
    %v252 = vsub.s32 0, %v251
    %v253 = vrot.slane %v248, %v252
    %v287 = vunpack.c.l.b16 %v216
    %v288 = vunpack.c.l.b16 %v217
    %v289 = vunpack.c.l.b16 %v218
    %v290 = vunpack.c.l.b16 %v219
    %v291 = vunpack.c.l.b16 %v220
    %v292 = vunpack.c.l.b16 %v221
    %v293 = vunpack.c.l.b16 %v222
    %v294 = vunpack.c.l.b16 %v223
    %v295 = vunpack.c.l.b16 %v224
    %v296 = vunpack.c.l.b16 %v225
    %v297 = vunpack.c.l.b16 %v226
    %v298 = vunpack.c.l.b16 %v227
    %v299 = vunpack.c.l.b16 %v228
    %v300 = vunpack.c.l.b16 %v229
    %v301 = vunpack.c.l.b16 %v230
    %v302 = vunpack.c.l.b16 %v231
    %v303 = vunpack.c.l.b16 %v232
    %v304 = vunpack.c.l.b16 %v233
    %v305 = vunpack.c.l.b16 %v234
    %v306 = vunpack.c.l.b16 %v235
    %v307 = vunpack.c.l.b16 %v236
    %v308 = vunpack.c.l.b16 %v237
    %v309 = vunpack.c.l.b16 %v238
    %v310 = vunpack.c.l.b16 %v239
    %v311 = vunpack.c.l.b16 %v240
    %v312 = vunpack.c.l.b16 %v241
    %v313 = vunpack.c.l.b16 %v242
    %v314 = vunpack.c.l.b16 %v243
    %v315 = vunpack.c.l.b16 %v244
    %v316 = vunpack.c.l.b16 %v245
    %v317 = vunpack.c.l.b16 %v246
    %v318 = vunpack.c.l.b16 %v247
    %v319 = vpack.c.b16 %v288, %v287
    %v320 = vpack.c.b16 %v290, %v289
    %v321 = vpack.c.b16 %v292, %v291
    %v322 = vpack.c.b16 %v294, %v293
    %v323 = vpack.c.b16 %v296, %v295
    %v324 = vpack.c.b16 %v298, %v297
    %v325 = vpack.c.b16 %v300, %v299
    %v326 = vpack.c.b16 %v302, %v301
    %v327 = vpack.c.b16 %v304, %v303
    %v328 = vpack.c.b16 %v306, %v305
    %v329 = vpack.c.b16 %v308, %v307
    %v330 = vpack.c.b16 %v310, %v309
    %v331 = vpack.c.b16 %v312, %v311
    %v332 = vpack.c.b16 %v314, %v313
    %v333 = vpack.c.b16 %v316, %v315
    %v334 = vpack.c.b16 %v318, %v317
    %351 = vmatprep.subr.bf16.mxu0 0
    %352 = vmatpush1.bf16.msra.mxu0 %v326
    %353 = vmatprep.subr.bf16.mxu0 0
    %354 = vmatpush1.bf16.msra.mxu0 %v325
    %355 = vmatprep.subr.bf16.mxu0 0
    %356 = vmatpush1.bf16.msra.mxu0 %v324
    %357 = vmatprep.subr.bf16.mxu0 0
    %358 = vmatpush1.bf16.msra.mxu0 %v323
    %359 = vmatprep.subr.bf16.mxu0 0
    %360 = vmatpush1.bf16.msra.mxu0 %v322
    %361 = vmatprep.subr.bf16.mxu0 0
    %362 = vmatpush1.bf16.msra.mxu0 %v321
    %363 = vmatprep.subr.bf16.mxu0 0
    %364 = vmatpush1.bf16.msra.mxu0 %v320
    %365 = vmatprep.subr.bf16.mxu0 0
    %366 = vmatpush1.bf16.msra.mxu0 %v319
    %367 = vmatprep.subr.bf16.mxu0 0
    %368 = vmatpush2.bf16.msra.mxu0 %v334
    %369 = vmatprep.subr.bf16.mxu0 0
    %370 = vmatpush2.bf16.msra.mxu0 %v333
    %371 = vmatprep.subr.bf16.mxu0 0
    %372 = vmatpush2.bf16.msra.mxu0 %v332
    %373 = vmatprep.subr.bf16.mxu0 0
    %374 = vmatpush2.bf16.msra.mxu0 %v331
    %375 = vmatprep.subr.bf16.mxu0 0
    %376 = vmatpush2.bf16.msra.mxu0 %v330
    %377 = vmatprep.subr.bf16.mxu0 0
    %378 = vmatpush2.bf16.msra.mxu0 %v329
    %379 = vmatprep.subr.bf16.mxu0 0
    %380 = vmatpush2.bf16.msra.mxu0 %v328
    %381 = vmatprep.subr.bf16.mxu0 0
    %382 = vmatpush2.bf16.msra.mxu0 %v327
    %383 = vmatprep.mubr.bf16.mxu0 %v215
    %384 = vmatmul.mubr.bf16.gmra.mxu0 %v214
    %v385 = vpop.f32.mrf.mxu0
    %v386 = vadd.f32 %v253, %v385
    %v387 = vpop.f32.mrf.mxu0
    %v388 = vpop.f32.mrf.mxu0
    %v389 = vpop.f32.mrf.mxu0
    %390 = vdwg.mxu0
    %v391 = vtanh.pop %v386
    %v392 = vpack.c.bf16 %v391, %v391
    %v393 = vld [vmem:[#allocation6] sm:$0xf]
    %v394 = vld [vmem:[#allocation6 + $0x4] sm:$0xf]
    %v395 = vld [vmem:[#allocation6 + $0x8] sm:$0xf]
    %v396 = vld [vmem:[#allocation6 + $0xc] sm:$0xf]
    %v397 = vld [vmem:[#allocation6 + $0x10] sm:$0xf]
    %v398 = vld [vmem:[#allocation6 + $0x14] sm:$0xf]
    %v399 = vld [vmem:[#allocation6 + $0x18] sm:$0xf]
    %v400 = vld [vmem:[#allocation6 + $0x1c] sm:$0xf]
    %v401 = vld [vmem:[#allocation6 + $0x20] sm:$0xf]
    %v402 = vld [vmem:[#allocation6 + $0x24] sm:$0xf]
    %v403 = vld [vmem:[#allocation6 + $0x28] sm:$0xf]
    %v404 = vld [vmem:[#allocation6 + $0x2c] sm:$0xf]
    %v405 = vld [vmem:[#allocation6 + $0x30] sm:$0xf]
    %v406 = vld [vmem:[#allocation6 + $0x34] sm:$0xf]
    %v407 = vld [vmem:[#allocation6 + $0x38] sm:$0xf]
    %v408 = vld [vmem:[#allocation6 + $0x3c] sm:$0xf]
    %v409 = vld [vmem:[%s8 + $0x3] sm:$0x1]
    %v411 = vlaneseq
    %v412 = vshrl.u32 %v411, 7
    %v413 = vsub.s32 0, %v412
    %v414 = vrot.slane %v409, %v413
    %v432 = vunpack.c.l.b16 %v393
    %v433 = vunpack.c.l.b16 %v394
    %v434 = vunpack.c.l.b16 %v395
    %v435 = vunpack.c.l.b16 %v396
    %v436 = vunpack.c.l.b16 %v397
    %v437 = vunpack.c.l.b16 %v398
    %v438 = vunpack.c.l.b16 %v399
    %v439 = vunpack.c.l.b16 %v400
    %v440 = vunpack.c.l.b16 %v401
    %v441 = vunpack.c.l.b16 %v402
    %v442 = vunpack.c.l.b16 %v403
    %v443 = vunpack.c.l.b16 %v404
    %v444 = vunpack.c.l.b16 %v405
    %v445 = vunpack.c.l.b16 %v406
    %v446 = vunpack.c.l.b16 %v407
    %v447 = vunpack.c.l.b16 %v408
    %v448 = vpack.c.b16 %v433, %v432
    %v449 = vpack.c.b16 %v435, %v434
    %v450 = vpack.c.b16 %v437, %v436
    %v451 = vpack.c.b16 %v439, %v438
    %v452 = vpack.c.b16 %v441, %v440
    %v453 = vpack.c.b16 %v443, %v442
    %v454 = vpack.c.b16 %v445, %v444
    %v455 = vpack.c.b16 %v447, %v446
    %464 = vmatprep.subr.bf16.mxu0 0
    %465 = vmatpush1.bf16.msra.mxu0 %v455
    %466 = vmatprep.subr.bf16.mxu0 0
    %467 = vmatpush1.bf16.msra.mxu0 %v454
    %468 = vmatprep.subr.bf16.mxu0 0
    %469 = vmatpush1.bf16.msra.mxu0 %v453
    %470 = vmatprep.subr.bf16.mxu0 0
    %471 = vmatpush1.bf16.msra.mxu0 %v452
    %472 = vmatprep.subr.bf16.mxu0 0
    %473 = vmatpush1.bf16.msra.mxu0 %v451
    %474 = vmatprep.subr.bf16.mxu0 0
    %475 = vmatpush1.bf16.msra.mxu0 %v450
    %476 = vmatprep.subr.bf16.mxu0 0
    %477 = vmatpush1.bf16.msra.mxu0 %v449
    %478 = vmatprep.subr.bf16.mxu0 0
    %479 = vmatpush1.bf16.msra.mxu0 %v448
    %480 = vmatprep.subr.bf16.mxu0 0
    %481 = vmatpush2.bf16.msra.mxu0 0
    %482 = vmatprep.subr.bf16.mxu0 0
    %483 = vmatpush2.bf16.msra.mxu0 0
    %484 = vmatprep.subr.bf16.mxu0 0
    %485 = vmatpush2.bf16.msra.mxu0 0
    %486 = vmatprep.subr.bf16.mxu0 0
    %487 = vmatpush2.bf16.msra.mxu0 0
    %488 = vmatprep.subr.bf16.mxu0 0
    %489 = vmatpush2.bf16.msra.mxu0 0
    %490 = vmatprep.subr.bf16.mxu0 0
    %491 = vmatpush2.bf16.msra.mxu0 0
    %492 = vmatprep.subr.bf16.mxu0 0
    %493 = vmatpush2.bf16.msra.mxu0 0
    %494 = vmatprep.subr.bf16.mxu0 0
    %495 = vmatpush2.bf16.msra.mxu0 0
    %496 = vmatprep.mubr.bf16.mxu0 0
    %497 = vmatmul.mubr.bf16.gmra.mxu0 %v392
    %v498 = vpop.f32.mrf.mxu0
    %v499 = vadd.f32 %v414, %v498
    %v500 = vpop.f32.mrf.mxu0
    %v501 = vpop.f32.mrf.mxu0
    %v502 = vpop.f32.mrf.mxu0
    %503 = vdwg.mxu0
    %v504 = vtanh.pop %v499
    %v505 = vpack.c.bf16 %v504, %v504
    %v506 = vld [vmem:[#allocation7] sm:$0xf]
    %v507 = vld [vmem:[#allocation7 + $0x4] sm:$0xf]
    %v508 = vld [vmem:[#allocation7 + $0x8] sm:$0xf]
    %v509 = vld [vmem:[#allocation7 + $0xc] sm:$0xf]
    %v510 = vld [vmem:[#allocation7 + $0x10] sm:$0xf]
    %v511 = vld [vmem:[#allocation7 + $0x14] sm:$0xf]
    %v512 = vld [vmem:[#allocation7 + $0x18] sm:$0xf]
    %v513 = vld [vmem:[#allocation7 + $0x1c] sm:$0xf]
    %v514 = vld [vmem:[#allocation7 + $0x20] sm:$0xf]
    %v515 = vld [vmem:[#allocation7 + $0x24] sm:$0xf]
    %v516 = vld [vmem:[#allocation7 + $0x28] sm:$0xf]
    %v517 = vld [vmem:[#allocation7 + $0x2c] sm:$0xf]
    %v518 = vld [vmem:[#allocation7 + $0x30] sm:$0xf]
    %v519 = vld [vmem:[#allocation7 + $0x34] sm:$0xf]
    %v520 = vld [vmem:[#allocation7 + $0x38] sm:$0xf]
    %v521 = vld [vmem:[#allocation7 + $0x3c] sm:$0xf]
    %v522 = vld [vmem:[%s8 + $0x4] sm:$0x1]
    %v524 = vlaneseq
    %v525 = vshrl.u32 %v524, 7
    %v526 = vsub.s32 0, %v525
    %v527 = vrot.slane %v522, %v526
    %v545 = vunpack.c.l.b16 %v506
    %v546 = vunpack.c.l.b16 %v507
    %v547 = vunpack.c.l.b16 %v508
    %v548 = vunpack.c.l.b16 %v509
    %v549 = vunpack.c.l.b16 %v510
    %v550 = vunpack.c.l.b16 %v511
    %v551 = vunpack.c.l.b16 %v512
    %v552 = vunpack.c.l.b16 %v513
    %v553 = vunpack.c.l.b16 %v514
    %v554 = vunpack.c.l.b16 %v515
    %v555 = vunpack.c.l.b16 %v516
    %v556 = vunpack.c.l.b16 %v517
    %v557 = vunpack.c.l.b16 %v518
    %v558 = vunpack.c.l.b16 %v519
    %v559 = vunpack.c.l.b16 %v520
    %v560 = vunpack.c.l.b16 %v521
    %v561 = vpack.c.b16 %v546, %v545
    %v562 = vpack.c.b16 %v548, %v547
    %v563 = vpack.c.b16 %v550, %v549
    %v564 = vpack.c.b16 %v552, %v551
    %v565 = vpack.c.b16 %v554, %v553
    %v566 = vpack.c.b16 %v556, %v555
    %v567 = vpack.c.b16 %v558, %v557
    %v568 = vpack.c.b16 %v560, %v559
    %577 = vmatprep.subr.bf16.mxu0 0
    %578 = vmatpush1.bf16.msra.mxu0 %v568
    %579 = vmatprep.subr.bf16.mxu0 0
    %580 = vmatpush1.bf16.msra.mxu0 %v567
    %581 = vmatprep.subr.bf16.mxu0 0
    %582 = vmatpush1.bf16.msra.mxu0 %v566
    %583 = vmatprep.subr.bf16.mxu0 0
    %584 = vmatpush1.bf16.msra.mxu0 %v565
    %585 = vmatprep.subr.bf16.mxu0 0
    %586 = vmatpush1.bf16.msra.mxu0 %v564
    %587 = vmatprep.subr.bf16.mxu0 0
    %588 = vmatpush1.bf16.msra.mxu0 %v563
    %589 = vmatprep.subr.bf16.mxu0 0
    %590 = vmatpush1.bf16.msra.mxu0 %v562
    %591 = vmatprep.subr.bf16.mxu0 0
    %592 = vmatpush1.bf16.msra.mxu0 %v561
    %593 = vmatprep.subr.bf16.mxu0 0
    %594 = vmatpush2.bf16.msra.mxu0 0
    %595 = vmatprep.subr.bf16.mxu0 0
    %596 = vmatpush2.bf16.msra.mxu0 0
    %597 = vmatprep.subr.bf16.mxu0 0
    %598 = vmatpush2.bf16.msra.mxu0 0
    %599 = vmatprep.subr.bf16.mxu0 0
    %600 = vmatpush2.bf16.msra.mxu0 0
    %601 = vmatprep.subr.bf16.mxu0 0
    %602 = vmatpush2.bf16.msra.mxu0 0
    %603 = vmatprep.subr.bf16.mxu0 0
    %604 = vmatpush2.bf16.msra.mxu0 0
    %605 = vmatprep.subr.bf16.mxu0 0
    %606 = vmatpush2.bf16.msra.mxu0 0
    %607 = vmatprep.subr.bf16.mxu0 0
    %608 = vmatpush2.bf16.msra.mxu0 0
    %609 = vmatprep.mubr.bf16.mxu0 0
    %610 = vmatmul.mubr.bf16.gmra.mxu0 %v505
    %v611 = vpop.f32.mrf.mxu0
    %v612 = vadd.f32 %v527, %v611
    %v613 = vpop.f32.mrf.mxu0
    %v614 = vpop.f32.mrf.mxu0
    %v615 = vpop.f32.mrf.mxu0
    %616 = vdwg.mxu0
    %v617 = vpack.c.bf16 %v612, %v612
    %v618 = vld [vmem:[#allocation9] sm:$0xf]
    %v619 = vld [vmem:[#allocation9 + $0x4] sm:$0xf]
    %v620 = vld [vmem:[#allocation9 + $0x8] sm:$0xf]
    %v621 = vld [vmem:[#allocation9 + $0xc] sm:$0xf]
    %v622 = vld [vmem:[#allocation9 + $0x10] sm:$0xf]
    %v623 = vld [vmem:[#allocation9 + $0x14] sm:$0xf]
    %v624 = vld [vmem:[#allocation9 + $0x18] sm:$0xf]
    %v625 = vld [vmem:[#allocation9 + $0x1c] sm:$0xf]
    %v626 = vld [vmem:[#allocation9 + $0x20] sm:$0xf]
    %v627 = vld [vmem:[#allocation9 + $0x24] sm:$0xf]
    %v628 = vld [vmem:[#allocation9 + $0x28] sm:$0xf]
    %v629 = vld [vmem:[#allocation9 + $0x2c] sm:$0xf]
    %v630 = vld [vmem:[#allocation9 + $0x30] sm:$0xf]
    %v631 = vld [vmem:[#allocation9 + $0x34] sm:$0xf]
    %v632 = vld [vmem:[#allocation9 + $0x38] sm:$0xf]
    %v633 = vld [vmem:[#allocation9 + $0x3c] sm:$0xf]
    %v634 = vld [vmem:[%s8 + $0x5] sm:$0x1]
    %v636 = vlaneseq
    %v637 = vshrl.u32 %v636, 7
    %v638 = vsub.s32 0, %v637
    %v639 = vrot.slane %v634, %v638
    %v657 = vunpack.c.l.b16 %v618
    %v658 = vunpack.c.l.b16 %v619
    %v659 = vunpack.c.l.b16 %v620
    %v660 = vunpack.c.l.b16 %v621
    %v661 = vunpack.c.l.b16 %v622
    %v662 = vunpack.c.l.b16 %v623
    %v663 = vunpack.c.l.b16 %v624
    %v664 = vunpack.c.l.b16 %v625
    %v665 = vunpack.c.l.b16 %v626
    %v666 = vunpack.c.l.b16 %v627
    %v667 = vunpack.c.l.b16 %v628
    %v668 = vunpack.c.l.b16 %v629
    %v669 = vunpack.c.l.b16 %v630
    %v670 = vunpack.c.l.b16 %v631
    %v671 = vunpack.c.l.b16 %v632
    %v672 = vunpack.c.l.b16 %v633
    %v673 = vpack.c.b16 %v658, %v657
    %v674 = vpack.c.b16 %v660, %v659
    %v675 = vpack.c.b16 %v662, %v661
    %v676 = vpack.c.b16 %v664, %v663
    %v677 = vpack.c.b16 %v666, %v665
    %v678 = vpack.c.b16 %v668, %v667
    %v679 = vpack.c.b16 %v670, %v669
    %v680 = vpack.c.b16 %v672, %v671
    %689 = vmatprep.subr.bf16.mxu0 0
    %690 = vmatpush1.bf16.msra.mxu0 %v680
    %691 = vmatprep.subr.bf16.mxu0 0
    %692 = vmatpush1.bf16.msra.mxu0 %v679
    %693 = vmatprep.subr.bf16.mxu0 0
    %694 = vmatpush1.bf16.msra.mxu0 %v678
    %695 = vmatprep.subr.bf16.mxu0 0
    %696 = vmatpush1.bf16.msra.mxu0 %v677
    %697 = vmatprep.subr.bf16.mxu0 0
    %698 = vmatpush1.bf16.msra.mxu0 %v676
    %699 = vmatprep.subr.bf16.mxu0 0
    %700 = vmatpush1.bf16.msra.mxu0 %v675
    %701 = vmatprep.subr.bf16.mxu0 0
    %702 = vmatpush1.bf16.msra.mxu0 %v674
    %703 = vmatprep.subr.bf16.mxu0 0
    %704 = vmatpush1.bf16.msra.mxu0 %v673
    %705 = vmatprep.subr.bf16.mxu0 0
    %706 = vmatpush2.bf16.msra.mxu0 0
    %707 = vmatprep.subr.bf16.mxu0 0
    %708 = vmatpush2.bf16.msra.mxu0 0
    %709 = vmatprep.subr.bf16.mxu0 0
    %710 = vmatpush2.bf16.msra.mxu0 0
    %711 = vmatprep.subr.bf16.mxu0 0
    %712 = vmatpush2.bf16.msra.mxu0 0
    %713 = vmatprep.subr.bf16.mxu0 0
    %714 = vmatpush2.bf16.msra.mxu0 0
    %715 = vmatprep.subr.bf16.mxu0 0
    %716 = vmatpush2.bf16.msra.mxu0 0
    %717 = vmatprep.subr.bf16.mxu0 0
    %718 = vmatpush2.bf16.msra.mxu0 0
    %719 = vmatprep.subr.bf16.mxu0 0
    %720 = vmatpush2.bf16.msra.mxu0 0
    %721 = vmatprep.mubr.bf16.mxu0 0
    %722 = vmatmul.mubr.bf16.gmra.mxu0 %v617
    %v723 = vpop.f32.mrf.mxu0
    %v724 = vadd.f32 %v639, %v723
    %v725 = vpop.f32.mrf.mxu0
    %v726 = vpop.f32.mrf.mxu0
    %v727 = vpop.f32.mrf.mxu0
    %728 = vdwg.mxu0
    %v729 = vtanh.pop %v724
    %v730 = vpack.c.bf16 %v729, %v729
    %v731 = vld [vmem:[#allocation10] sm:$0xf]
    %v732 = vld [vmem:[#allocation10 + $0x4] sm:$0xf]
    %v733 = vld [vmem:[#allocation10 + $0x8] sm:$0xf]
    %v734 = vld [vmem:[#allocation10 + $0xc] sm:$0xf]
    %v735 = vld [vmem:[#allocation10 + $0x10] sm:$0xf]
    %v736 = vld [vmem:[#allocation10 + $0x14] sm:$0xf]
    %v737 = vld [vmem:[#allocation10 + $0x18] sm:$0xf]
    %v738 = vld [vmem:[#allocation10 + $0x1c] sm:$0xf]
    %v739 = vld [vmem:[#allocation10 + $0x20] sm:$0xf]
    %v740 = vld [vmem:[#allocation10 + $0x24] sm:$0xf]
    %v741 = vld [vmem:[#allocation10 + $0x28] sm:$0xf]
    %v742 = vld [vmem:[#allocation10 + $0x2c] sm:$0xf]
    %v743 = vld [vmem:[#allocation10 + $0x30] sm:$0xf]
    %v744 = vld [vmem:[#allocation10 + $0x34] sm:$0xf]
    %v745 = vld [vmem:[#allocation10 + $0x38] sm:$0xf]
    %v746 = vld [vmem:[#allocation10 + $0x3c] sm:$0xf]
    %v747 = vld [vmem:[%s8 + $0x6] sm:$0x1]
    %v749 = vlaneseq
    %v750 = vshrl.u32 %v749, 7
    %v751 = vsub.s32 0, %v750
    %v752 = vrot.slane %v747, %v751
    %v770 = vunpack.c.l.b16 %v731
    %v771 = vunpack.c.l.b16 %v732
    %v772 = vunpack.c.l.b16 %v733
    %v773 = vunpack.c.l.b16 %v734
    %v774 = vunpack.c.l.b16 %v735
    %v775 = vunpack.c.l.b16 %v736
    %v776 = vunpack.c.l.b16 %v737
    %v777 = vunpack.c.l.b16 %v738
    %v778 = vunpack.c.l.b16 %v739
    %v779 = vunpack.c.l.b16 %v740
    %v780 = vunpack.c.l.b16 %v741
    %v781 = vunpack.c.l.b16 %v742
    %v782 = vunpack.c.l.b16 %v743
    %v783 = vunpack.c.l.b16 %v744
    %v784 = vunpack.c.l.b16 %v745
    %v785 = vunpack.c.l.b16 %v746
    %v786 = vpack.c.b16 %v771, %v770
    %v787 = vpack.c.b16 %v773, %v772
    %v788 = vpack.c.b16 %v775, %v774
    %v789 = vpack.c.b16 %v777, %v776
    %v790 = vpack.c.b16 %v779, %v778
    %v791 = vpack.c.b16 %v781, %v780
    %v792 = vpack.c.b16 %v783, %v782
    %v793 = vpack.c.b16 %v785, %v784
    %802 = vmatprep.subr.bf16.mxu0 0
    %803 = vmatpush1.bf16.msra.mxu0 %v793
    %804 = vmatprep.subr.bf16.mxu0 0
    %805 = vmatpush1.bf16.msra.mxu0 %v792
    %806 = vmatprep.subr.bf16.mxu0 0
    %807 = vmatpush1.bf16.msra.mxu0 %v791
    %808 = vmatprep.subr.bf16.mxu0 0
    %809 = vmatpush1.bf16.msra.mxu0 %v790
    %810 = vmatprep.subr.bf16.mxu0 0
    %811 = vmatpush1.bf16.msra.mxu0 %v789
    %812 = vmatprep.subr.bf16.mxu0 0
    %813 = vmatpush1.bf16.msra.mxu0 %v788
    %814 = vmatprep.subr.bf16.mxu0 0
    %815 = vmatpush1.bf16.msra.mxu0 %v787
    %816 = vmatprep.subr.bf16.mxu0 0
    %817 = vmatpush1.bf16.msra.mxu0 %v786
    %818 = vmatprep.subr.bf16.mxu0 0
    %819 = vmatpush2.bf16.msra.mxu0 0
    %820 = vmatprep.subr.bf16.mxu0 0
    %821 = vmatpush2.bf16.msra.mxu0 0
    %822 = vmatprep.subr.bf16.mxu0 0
    %823 = vmatpush2.bf16.msra.mxu0 0
    %824 = vmatprep.subr.bf16.mxu0 0
    %825 = vmatpush2.bf16.msra.mxu0 0
    %826 = vmatprep.subr.bf16.mxu0 0
    %827 = vmatpush2.bf16.msra.mxu0 0
    %828 = vmatprep.subr.bf16.mxu0 0
    %829 = vmatpush2.bf16.msra.mxu0 0
    %830 = vmatprep.subr.bf16.mxu0 0
    %831 = vmatpush2.bf16.msra.mxu0 0
    %832 = vmatprep.subr.bf16.mxu0 0
    %833 = vmatpush2.bf16.msra.mxu0 0
    %834 = vmatprep.mubr.bf16.mxu0 0
    %835 = vmatmul.mubr.bf16.gmra.mxu0 %v730
    %v836 = vpop.f32.mrf.mxu0
    %v837 = vadd.f32 %v752, %v836
    %v838 = vpop.f32.mrf.mxu0
    %v839 = vpop.f32.mrf.mxu0
    %v840 = vpop.f32.mrf.mxu0
    %841 = vdwg.mxu0
    %v842 = vlaneseq
    %v843 = vshrl.u32 %v842, 7
    %s844 = smul.u32 0, 8
    %v845 = vstv %s844
    %v846 = vadd.s32 %v845, %v843
    %vm847 = vcmp.lt.s32.totalorder %v846, 8
    %v848 = vsel %vm847, 1, 0
    %v849 = vcvt.s32.f32 %v848
    %v850 = vld [vmem:[%s1] sm:$0xff]
    %v851 = vsub.f32 %v837, %v850
    %v852 = vmul.f32 %v849, %v851
    %v853 = vmul.f32 %v852, %v851
    %854 = vadd.xlane.f32.xlu0 %v853
    %v855 = vpop.xlane.xlu0 %854
    %v856 = vrot.slane %v855, 4
    %v857 = vadd.f32 %v855, %v856
    %v858 = vrot.slane %v857, 2
    %v859 = vadd.f32 %v857, %v858
    %v860 = vrot.slane %v859, 1
    %v861 = vadd.f32 %v859, %v860
    %s862 = vtos %v861
    %v863 = vmul.f32 %v849, %v612
    %v864 = vmul.f32 %v863, %v612
    %865 = vadd.xlane.f32.xlu0 %v864
    %v866 = vpop.xlane.xlu0 %865
    %v867 = vrot.slane %v866, 4
    %v868 = vadd.f32 %v866, %v867
    %v869 = vrot.slane %v868, 2
    %v870 = vadd.f32 %v868, %v869
    %v871 = vrot.slane %v870, 1
    %v872 = vadd.f32 %v870, %v871
    %s873 = vtos %v872
    %874 = vst [vmem:[%s9] sm:$0xff] %v612
    %875 = vst [vmem:[%s9 + $0x8] sm:$0xff] %v837
    %v876 = vlaneseq
    %v877 = vand.u32 %v876, 127
    %vm878 = vcmp.eq.s32.totalorder %v877, 0
    %vm879 = vcmp.eq.s32.totalorder %v877, 1
    %v880 = vstv %s873
    %v881 = vsel %vm879, %v880, 0.0
    %v882 = vstv %s862
    %v883 = vsel %vm878, %v882, %v881
    %884 = vst [vmem:[%s10] sm:$0xff] %v883
    // Predicated region
    $region62: #{context_encoder_forward.1} parent=1 // pred_check
      _
    $region63: #{context_encoder_forward.1} parent=1 // pred_check_branch
      %886 = sbr.rel (0) target = $region65
    $region64: #{context_encoder_forward.1} parent=1 // pred_region
      _
    $region65: #{context_encoder_forward.1} parent=1 // pred_fallthru
      _
    // Predicated region
    $region66: #{context_encoder_forward.1} parent=1 // pred_check
      _
    $region67: #{context_encoder_forward.1} parent=1 // pred_check_branch
      %888 = sbr.rel (0) target = $region69
    $region68: #{context_encoder_forward.1} parent=1 // pred_region
      _
    $region69: #{context_encoder_forward.1} parent=1 // pred_fallthru
      _
    // Predicated region
    $region70: #{context_encoder_forward.1} parent=1 // pred_check
      _
    $region71: #{context_encoder_forward.1} parent=1 // pred_check_branch
      %890 = sbr.rel (0) target = $region73
    $region72: #{context_encoder_forward.1} parent=1 // pred_region
      _
    $region73: #{context_encoder_forward.1} parent=1 // pred_fallthru
      _
    // Predicated region
    $region74: #{context_encoder_forward.1} parent=1 // pred_check
      _
    $region75: #{context_encoder_forward.1} parent=1 // pred_check_branch
      %892 = sbr.rel (0) target = $region77
    $region76: #{context_encoder_forward.1} parent=1 // pred_region
      _
    $region77: #{context_encoder_forward.1} parent=1 // pred_fallthru
      _
    %893 = vsyncpa [#allocation3], 1
    %894 = vsyncpa [#allocation5], 1
    %895 = vsyncpa [#allocation8], 1
    %896 = vsyncpa [#allocation11], 1

</llo_original>
